<compile_context>
chip_gen: v7x
topology: tpu7x:2x2x1
jax: 0.10.0
libtpu: 0.0.40
codegen_flags: <defaults>
</compile_context>

<pallas_src>
import math
import numpy as np
import jax
import jax.numpy as jnp
from jax.experimental import pallas as pl
from jax.experimental.pallas import tpu as pltpu


# ----------------------------- schedules (glue) -----------------------------

def cosine_beta_schedule(timesteps, s=0.008):
    steps = timesteps + 1
    x = np.linspace(0, timesteps, steps, dtype=np.float64)
    alphas_cumprod = np.cos((x / timesteps + s) / (1 + s) * math.pi * 0.5) ** 2
    alphas_cumprod = alphas_cumprod / alphas_cumprod[0]
    betas = 1.0 - alphas_cumprod[1:] / alphas_cumprod[:-1]
    return np.clip(betas, 0.0, 0.999)


def make_diffusion_buffers(timesteps, objective="pred_noise"):
    betas = cosine_beta_schedule(timesteps)
    alphas = 1.0 - betas
    alphas_cumprod = np.cumprod(alphas, axis=0)
    sqrt_alphas_cumprod = np.sqrt(alphas_cumprod)
    sqrt_one_minus_alphas_cumprod = np.sqrt(1.0 - alphas_cumprod)
    snr = alphas_cumprod / (1.0 - alphas_cumprod)
    if objective == "pred_noise":
        loss_weight = np.ones_like(snr)
    elif objective == "pred_x0":
        loss_weight = snr
    else:  # pred_v
        loss_weight = snr / (snr + 1.0)
    f32 = lambda a: jnp.asarray(a, dtype=jnp.float32)
    return (f32(sqrt_alphas_cumprod),
            f32(sqrt_one_minus_alphas_cumprod),
            f32(loss_weight))


# ------------------------------- Pallas kernel ------------------------------

def _diffusion_loss_kernel(img_ref, noise_ref,              # (B*C, N) slabs
                           sac_ref, somac_ref, lwsum_ref,   # (B*C, 1) columns
                           w_ref, b_ref,                    # fused weights / bias
                           loss_ref):                       # SMEM (1,) scalar out
    # Whole batch as one (B*C, N) slab (one (8,128) f32 vreg at B=2, C=4, N=128).
    x0 = img_ref[...] * 2.0 - 1.0                 # normalize_to_neg_one_to_one
    eps = noise_ref[...]

    # q_sample: x_t = sqrt(acp[t_b]) * x0 + sqrt(1 - acp[t_b]) * eps
    # coefficients are per-row (batch -> channel-row broadcast done in wrapper).
    x = sac_ref[...] * x0 + somac_ref[...] * eps

    BC, N = x.shape
    lane = jax.lax.broadcasted_iota(jnp.int32, (BC, N), dimension=1)
    # Shifted taps with zero padding at the sequence edges; pltpu.roll needs a
    # non-negative shift, so the "+1" tap rolls by N-1.
    x_prev = jnp.where(lane == 0, 0.0, pltpu.roll(x, shift=1, axis=1))          # x[:, n-1]
    x_next = jnp.where(lane == N - 1, 0.0, pltpu.roll(x, shift=N - 1, axis=1))  # x[:, n+1]

    # Stand-in model: Conv1d(C, C, kernel_size=3, padding=1), shared across B.
    # Single fused MXU matmul:  (B*C, 3*B*C) @ (3*B*C, N)  with the weight
    # slab block-diagonal over batch (built in the wrapper).
    taps = jnp.concatenate([x_prev, x, x_next], axis=0)          # (3*B*C, N)
    out = jnp.dot(w_ref[...], taps, preferred_element_type=jnp.float32)
    out = out + b_ref[...]                                       # (B*C, 1) broadcast

    # objective == 'pred_noise' -> target = eps.
    # Lane-reduce per row first, then weight with loss_weight[t_b]/(B*C*N)
    # (carried by lwsum_ref) and sum over rows -> the final scalar loss.
    diff = out - eps
    row_sums = jnp.sum(diff * diff, axis=1, keepdims=True)       # (B*C, 1)
    loss_ref[0] = jnp.sum(row_sums * lwsum_ref[...])


@jax.jit
def gaussian_diffusion_loss(img, t, noise, W, bias,
                            sqrt_ac, sqrt_1mac, loss_weight):
    B, C, N = img.shape
    BC = B * C

    # ---- wrapper-side layout plumbing (tiny; fused with the kernel by jit) ----
    img2 = img.reshape(BC, N)
    noise2 = noise.reshape(BC, N)

    # extract(buffer, t, shape) == gather at t, broadcast per channel row.
    sac_col = jnp.repeat(sqrt_ac[t].astype(jnp.float32), C).reshape(BC, 1)
    somac_col = jnp.repeat(sqrt_1mac[t].astype(jnp.float32), C).reshape(BC, 1)
    lwsum_col = (jnp.repeat(loss_weight[t].astype(jnp.float32), C)
                 .reshape(BC, 1) / float(B * C * N))

    # Fused conv weights: W_fused[b*C + o, k*B*C + b*C + c] = W[k, o, c]
    # (block-diagonal over batch for each tap, taps concatenated along K).
    eyeB = jnp.eye(B, dtype=jnp.float32)
    W_fused = jnp.concatenate([jnp.kron(eyeB, W[k]) for k in range(3)],
                              axis=1)                          # (B*C, 3*B*C)
    bias_col = jnp.tile(bias.astype(jnp.float32), (B, 1))      # (B*C, 1)

    loss = pl.pallas_call(
        _diffusion_loss_kernel,
        out_shape=jax.ShapeDtypeStruct((1,), jnp.float32),
        grid=(1,),
        in_specs=[
            pl.BlockSpec((BC, N), lambda i: (0, 0)),
            pl.BlockSpec((BC, N), lambda i: (0, 0)),
            pl.BlockSpec((BC, 1), lambda i: (0, 0)),
            pl.BlockSpec((BC, 1), lambda i: (0, 0)),
            pl.BlockSpec((BC, 1), lambda i: (0, 0)),
            pl.BlockSpec((BC, 3 * BC), lambda i: (0, 0)),
            pl.BlockSpec((BC, 1), lambda i: (0, 0)),
        ],
        out_specs=pl.BlockSpec((1,), lambda i: (0,), memory_space=pltpu.SMEM),
        compiler_params=pltpu.CompilerParams(
            dimension_semantics=("arbitrary",)),
    )(img2, noise2, sac_col, somac_col, lwsum_col, W_fused, bias_col)

    return loss[0]


# ----------------------------- pure-JAX reference ---------------------------

def _reference_loss(img, t, noise, W, bias, sqrt_ac, sqrt_1mac, loss_weight):
    B, C, N = img.shape
    x0 = img * 2.0 - 1.0
    sac = sqrt_ac[t][:, None, None]
    somac = sqrt_1mac[t][:, None, None]
    x = sac * x0 + somac * noise
    xp = jnp.pad(x, ((0, 0), (0, 0), (1, 1)))
    xs = jnp.stack([xp[:, :, 0:N], xp[:, :, 1:N + 1], xp[:, :, 2:N + 2]], 0)
    out = jnp.einsum("kbcn,koc->bon", xs, W) + bias[None, :, :]
    diff = out - noise
    per_b = jnp.mean(diff * diff, axis=(1, 2)) * loss_weight[t]
    return jnp.mean(per_b)


# ----------------------------------- main ------------------------------------

if __name__ == "__main__":
    B, C, N = 2, 4, 128        # batch, channels, seq_length
    T = 1000                   # timesteps

    sqrt_ac, sqrt_1mac, loss_weight = make_diffusion_buffers(T, "pred_noise")

    key = jax.random.PRNGKey(0)
    k_img, k_t, k_noise, k_w, k_b = jax.random.split(key, 5)

    img = jax.random.uniform(k_img, (B, C, N), dtype=jnp.float32)        # raw data in [0, 1]
    t = jax.random.randint(k_t, (B,), 0, T)                              # torch.randint equiv.
    noise = jax.random.normal(k_noise, (B, C, N), dtype=jnp.float32)     # torch.randn_like equiv.

    # Deterministic stand-in Conv1d parameters (kaiming-uniform-like bounds).
    fan_in = C * 3
    bound = 1.0 / math.sqrt(fan_in)
    W = jax.random.uniform(k_w, (3, C, C), dtype=jnp.float32,
                           minval=-bound, maxval=bound)   # W[k, out_ch, in_ch]
    bias = jax.random.uniform(k_b, (C, 1), dtype=jnp.float32,
                              minval=-bound, maxval=bound)

    loss = gaussian_diffusion_loss(img, t, noise, W, bias,
                                   sqrt_ac, sqrt_1mac, loss_weight)
    loss = jax.block_until_ready(loss)

    ref = _reference_loss(img, t, noise, W, bias, sqrt_ac, sqrt_1mac, loss_weight)
    ref = jax.block_until_ready(ref)
    assert jnp.allclose(loss, ref, atol=1e-4, rtol=1e-4), (loss, ref)

    print("KERNEL_OK")
</pallas_src>

<mosaic_0001>
module attributes {stable_mosaic.version = 11 : i64} {
  func.func @_diffusion_loss_kernel(%arg0: i32, %arg1: memref<8x128xf32, #tpu.memory_space<vmem>>, %arg2: memref<8x128xf32, #tpu.memory_space<vmem>>, %arg3: memref<8x1xf32, #tpu.memory_space<vmem>>, %arg4: memref<8x1xf32, #tpu.memory_space<vmem>>, %arg5: memref<8x1xf32, #tpu.memory_space<vmem>>, %arg6: memref<8x24xf32, #tpu.memory_space<vmem>>, %arg7: memref<8x1xf32, #tpu.memory_space<vmem>>, %arg8: memref<1xf32, #tpu.memory_space<smem>>) attributes {dimension_semantics = [#tpu.dimension_semantics<arbitrary>], iteration_bounds = array<i64: 1>, scalar_prefetch = 0 : i64, scratch_operands = 0 : i64, tpu.core_type = #tpu.core_type<tc>, window_params = [{pipeline_mode = #tpu.pipeline_mode<synchronous>, transform_indices = @transform_0, window_bounds = array<i64: 8, 128>}, {pipeline_mode = #tpu.pipeline_mode<synchronous>, transform_indices = @transform_1, window_bounds = array<i64: 8, 128>}, {pipeline_mode = #tpu.pipeline_mode<synchronous>, transform_indices = @transform_2, window_bounds = array<i64: 8, 1>}, {pipeline_mode = #tpu.pipeline_mode<synchronous>, transform_indices = @transform_3, window_bounds = array<i64: 8, 1>}, {pipeline_mode = #tpu.pipeline_mode<synchronous>, transform_indices = @transform_4, window_bounds = array<i64: 8, 1>}, {pipeline_mode = #tpu.pipeline_mode<synchronous>, transform_indices = @transform_5, window_bounds = array<i64: 8, 24>}, {pipeline_mode = #tpu.pipeline_mode<synchronous>, transform_indices = @transform_6, window_bounds = array<i64: 8, 1>}, {transform_indices = @transform_7, window_bounds = array<i64: 1>}]} {
    %c0 = arith.constant 0 : index
    %c0_0 = arith.constant 0 : index
    %0 = vector.load %arg1[%c0, %c0_0] : memref<8x128xf32, #tpu.memory_space<vmem>>, vector<8x128xf32>
    %cst = arith.constant 2.000000e+00 : f32
    %1 = vector.broadcast %cst : f32 to vector<8x128xf32>
    %2 = arith.mulf %0, %1 : vector<8x128xf32>
    %cst_1 = arith.constant 1.000000e+00 : f32
    %3 = vector.broadcast %cst_1 : f32 to vector<8x128xf32>
    %4 = arith.subf %2, %3 : vector<8x128xf32>
    %c0_2 = arith.constant 0 : index
    %c0_3 = arith.constant 0 : index
    %5 = vector.load %arg2[%c0_2, %c0_3] : memref<8x128xf32, #tpu.memory_space<vmem>>, vector<8x128xf32>
    %c0_4 = arith.constant 0 : index
    %c0_5 = arith.constant 0 : index
    %6 = vector.load %arg3[%c0_4, %c0_5] : memref<8x1xf32, #tpu.memory_space<vmem>>, vector<8x1xf32>
    %7 = vector.broadcast %6 : vector<8x1xf32> to vector<8x128xf32>
    %8 = arith.mulf %7, %4 : vector<8x128xf32>
    %c0_6 = arith.constant 0 : index
    %c0_7 = arith.constant 0 : index
    %9 = vector.load %arg4[%c0_6, %c0_7] : memref<8x1xf32, #tpu.memory_space<vmem>>, vector<8x1xf32>
    %10 = vector.broadcast %9 : vector<8x1xf32> to vector<8x128xf32>
    %11 = arith.mulf %10, %5 : vector<8x128xf32>
    %12 = arith.addf %8, %11 : vector<8x128xf32>
    %13 = tpu.iota {dimensions = array<i32: 1>} : vector<8x128xi32>
    %c0_i32 = arith.constant 0 : i32
    %14 = vector.broadcast %c0_i32 : i32 to vector<8x128xi32>
    %15 = arith.cmpi eq, %13, %14 : vector<8x128xi32>
    %c1_i32 = arith.constant 1 : i32
    %16 = tpu.dynamic_rotate %12 by %c1_i32 dim 1 : vector<8x128xf32>, i32 -> vector<8x128xf32>
    %cst_8 = arith.constant 0.000000e+00 : f32
    %17 = vector.broadcast %cst_8 : f32 to vector<8x128xf32>
    %18 = arith.select %15, %17, %16 : vector<8x128xi1>, vector<8x128xf32>
    %c127_i32 = arith.constant 127 : i32
    %19 = vector.broadcast %c127_i32 : i32 to vector<8x128xi32>
    %20 = arith.cmpi eq, %13, %19 : vector<8x128xi32>
    %c127_i32_9 = arith.constant 127 : i32
    %21 = tpu.dynamic_rotate %12 by %c127_i32_9 dim 1 : vector<8x128xf32>, i32 -> vector<8x128xf32>
    %cst_10 = arith.constant 0.000000e+00 : f32
    %22 = vector.broadcast %cst_10 : f32 to vector<8x128xf32>
    %23 = arith.select %20, %22, %21 : vector<8x128xi1>, vector<8x128xf32>
    %24 = tpu.concatenate %18, %12, %23 in 0 : vector<8x128xf32>, vector<8x128xf32>, vector<8x128xf32> -> vector<24x128xf32>
    %c0_11 = arith.constant 0 : index
    %c0_12 = arith.constant 0 : index
    %25 = vector.load %arg6[%c0_11, %c0_12] : memref<8x24xf32, #tpu.memory_space<vmem>>, vector<8x24xf32>
    %cst_13 = arith.constant dense<0.000000e+00> : vector<8x128xf32>
    %26 = tpu.matmul %25, %24, %cst_13 {dimension_numbers = #tpu.dot_dimension_numbers<[1], [0], [0], [1], [0, 0, 1, 1], [], []>} : vector<8x24xf32>, vector<24x128xf32>, vector<8x128xf32> -> vector<8x128xf32>
    %c0_14 = arith.constant 0 : index
    %c0_15 = arith.constant 0 : index
    %27 = vector.load %arg7[%c0_14, %c0_15] : memref<8x1xf32, #tpu.memory_space<vmem>>, vector<8x1xf32>
    %28 = vector.broadcast %27 : vector<8x1xf32> to vector<8x128xf32>
    %29 = arith.addf %26, %28 : vector<8x128xf32>
    %30 = arith.subf %29, %5 : vector<8x128xf32>
    %31 = arith.mulf %30, %30 : vector<8x128xf32>
    %cst_16 = arith.constant dense<0.000000e+00> : vector<8xf32>
    %32 = vector.multi_reduction <add>, %31, %cst_16 [1] : vector<8x128xf32> to vector<8xf32>
    %33 = vector.shape_cast %32 : vector<8xf32> to vector<8x1xf32>
    %c0_17 = arith.constant 0 : index
    %c0_18 = arith.constant 0 : index
    %34 = vector.load %arg5[%c0_17, %c0_18] : memref<8x1xf32, #tpu.memory_space<vmem>>, vector<8x1xf32>
    %35 = arith.mulf %33, %34 : vector<8x1xf32>
    %36 = vector.shape_cast %35 : vector<8x1xf32> to vector<1x8x1xf32>
    %cst_19 = arith.constant dense<0.000000e+00> : vector<1xf32>
    %37 = vector.multi_reduction <add>, %36, %cst_19 [1, 2] : vector<1x8x1xf32> to vector<1xf32>
    %38 = vector.shape_cast %37 : vector<1xf32> to vector<1x1x1xf32>
    %39 = vector.extract %38[0, 0, 0] : f32 from vector<1x1x1xf32>
    %c0_20 = arith.constant 0 : index
    %40 = memref.load %arg8[%c0_20] : memref<1xf32, #tpu.memory_space<smem>>
    memref.store %39, %arg8[%c0_20] : memref<1xf32, #tpu.memory_space<smem>>
    return
  }
  func.func @transform_0(%arg0: i32) -> (i32, i32) {
    %c0_i32 = arith.constant 0 : i32
    %c0_i32_0 = arith.constant 0 : i32
    %c0_i32_1 = arith.constant 0 : i32
    return %c0_i32, %c0_i32_0 : i32, i32
  }
  func.func @transform_1(%arg0: i32) -> (i32, i32) {
    %c0_i32 = arith.constant 0 : i32
    %c0_i32_0 = arith.constant 0 : i32
    %c0_i32_1 = arith.constant 0 : i32
    return %c0_i32, %c0_i32_0 : i32, i32
  }
  func.func @transform_2(%arg0: i32) -> (i32, i32) {
    %c0_i32 = arith.constant 0 : i32
    %c0_i32_0 = arith.constant 0 : i32
    %c0_i32_1 = arith.constant 0 : i32
    return %c0_i32, %c0_i32_0 : i32, i32
  }
  func.func @transform_3(%arg0: i32) -> (i32, i32) {
    %c0_i32 = arith.constant 0 : i32
    %c0_i32_0 = arith.constant 0 : i32
    %c0_i32_1 = arith.constant 0 : i32
    return %c0_i32, %c0_i32_0 : i32, i32
  }
  func.func @transform_4(%arg0: i32) -> (i32, i32) {
    %c0_i32 = arith.constant 0 : i32
    %c0_i32_0 = arith.constant 0 : i32
    %c0_i32_1 = arith.constant 0 : i32
    return %c0_i32, %c0_i32_0 : i32, i32
  }
  func.func @transform_5(%arg0: i32) -> (i32, i32) {
    %c0_i32 = arith.constant 0 : i32
    %c0_i32_0 = arith.constant 0 : i32
    %c0_i32_1 = arith.constant 0 : i32
    return %c0_i32, %c0_i32_0 : i32, i32
  }
  func.func @transform_6(%arg0: i32) -> (i32, i32) {
    %c0_i32 = arith.constant 0 : i32
    %c0_i32_0 = arith.constant 0 : i32
    %c0_i32_1 = arith.constant 0 : i32
    return %c0_i32, %c0_i32_0 : i32, i32
  }
  func.func @transform_7(%arg0: i32) -> i32 {
    %c0_i32 = arith.constant 0 : i32
    %c0_i32_0 = arith.constant 0 : i32
    return %c0_i32 : i32
  }
}

</mosaic_0001>

<llo_original>
// kernel: gaussian_diffusion_loss.1
$region0: #{gaussian_diffusion_loss.1}
  #allocation0 [shape = 'u32[]', space=smem, size = 0x4, offset = 0x4, fixed_abs, tag = 'smem constant byte address 0x4 - core index']
  #allocation1 [shape = 'u32[144,128]{1,0:T(1,128)}', space=vmem, size = 0x12000, scoped, tag = 'internal scratch']
  %s0 = inlined_call_operand.vmem [shape: f32[8,128], index: 0, kind: input, shape index: {}]
  %s1 = inlined_call_operand.vmem [shape: f32[8,128], index: 1, kind: input, shape index: {}]
  %s2 = inlined_call_operand.vmem [shape: f32[8,1], index: 2, kind: input, shape index: {}]
  %s3 = inlined_call_operand.vmem [shape: f32[8,1], index: 3, kind: input, shape index: {}]
  %s4 = inlined_call_operand.vmem [shape: f32[8,1], index: 4, kind: input, shape index: {}]
  %s5 = inlined_call_operand.vmem [shape: f32[8,24], index: 5, kind: input, shape index: {}]
  %s6 = inlined_call_operand.vmem [shape: f32[8,1], index: 6, kind: input, shape index: {}]
  %s7 = inlined_call_operand.hbm [shape: f32[1], index: 7, kind: output, shape index: {}]
  %s8 = sld [smem:[#allocation0]]
  $region38: #{gaussian_diffusion_loss.1} parent=0
    _
  %s10 = ssub.s32 1, %s8
  %s11 = scalar_select 0, %s10, %s8
  $region1: #{gaussian_diffusion_loss.1} parent=0
    #allocation2 [shape = 'u8[512]{0}', space=smem, size = 0x200, scoped, tag = 'output window, operand 0, single buffered']
    #allocation3 [shape = 's32[1]{0}', space=sflag, size = 0x4, scoped, tag = 'scoped memory for gaussian_diffusion_loss.1']
    %12 = vsyncpa [#allocation3], 0
    // Predicated region
    $region2: #{gaussian_diffusion_loss.1} parent=1 // pred_check
      _
    $region3: #{gaussian_diffusion_loss.1} parent=1 // pred_check_branch
      %14 = sbr.rel (0) target = $region5
    $region4: #{gaussian_diffusion_loss.1} parent=1 // pred_region
      _
    $region5: #{gaussian_diffusion_loss.1} parent=1 // pred_fallthru
      _
    // Predicated region
    $region6: #{gaussian_diffusion_loss.1} parent=1 // pred_check
      _
    $region7: #{gaussian_diffusion_loss.1} parent=1 // pred_check_branch
      %16 = sbr.rel (0) target = $region9
    $region8: #{gaussian_diffusion_loss.1} parent=1 // pred_region
      _
    $region9: #{gaussian_diffusion_loss.1} parent=1 // pred_fallthru
      _
    // Predicated region
    $region10: #{gaussian_diffusion_loss.1} parent=1 // pred_check
      _
    $region11: #{gaussian_diffusion_loss.1} parent=1 // pred_check_branch
      %18 = sbr.rel (0) target = $region13
    $region12: #{gaussian_diffusion_loss.1} parent=1 // pred_region
      _
    $region13: #{gaussian_diffusion_loss.1} parent=1 // pred_fallthru
      _
    // Predicated region
    $region14: #{gaussian_diffusion_loss.1} parent=1 // pred_check
      _
    $region15: #{gaussian_diffusion_loss.1} parent=1 // pred_check_branch
      %20 = sbr.rel (0) target = $region17
    $region16: #{gaussian_diffusion_loss.1} parent=1 // pred_region
      _
    $region17: #{gaussian_diffusion_loss.1} parent=1 // pred_fallthru
      _
    // Predicated region
    $region18: #{gaussian_diffusion_loss.1} parent=1 // pred_check
      _
    $region19: #{gaussian_diffusion_loss.1} parent=1 // pred_check_branch
      %22 = sbr.rel (0) target = $region21
    $region20: #{gaussian_diffusion_loss.1} parent=1 // pred_region
      _
    $region21: #{gaussian_diffusion_loss.1} parent=1 // pred_fallthru
      _
    // Predicated region
    $region22: #{gaussian_diffusion_loss.1} parent=1 // pred_check
      _
    $region23: #{gaussian_diffusion_loss.1} parent=1 // pred_check_branch
      %24 = sbr.rel (0) target = $region25
    $region24: #{gaussian_diffusion_loss.1} parent=1 // pred_region
      _
    $region25: #{gaussian_diffusion_loss.1} parent=1 // pred_fallthru
      _
    // Predicated region
    $region26: #{gaussian_diffusion_loss.1} parent=1 // pred_check
      _
    $region27: #{gaussian_diffusion_loss.1} parent=1 // pred_check_branch
      %26 = sbr.rel (0) target = $region29
    $region28: #{gaussian_diffusion_loss.1} parent=1 // pred_region
      _
    $region29: #{gaussian_diffusion_loss.1} parent=1 // pred_fallthru
      _
    %v27 = vld [vmem:[%s0] sm:$0xff]
    %v28 = vmul.f32 %v27, 2.0
    %v29 = vsub.f32 %v28, 1.0
    %v30 = vld [vmem:[%s1] sm:$0xff]
    %v31 = vld [vmem:[%s2] sm:$0xff]
    %33 = vset.pattern.permute.xlu0 0
    %34 = vperm.xlu0 %33, %v31
    %v35 = vpop.permute.xlu0 %34
    %v37 = vmul.f32 %v35, %v29
    %v38 = vld [vmem:[%s3] sm:$0xff]
    %40 = vset.pattern.permute.xlu0 0
    %41 = vperm.xlu0 %40, %v38
    %v42 = vpop.permute.xlu0 %41
    %v44 = vmul.f32 %v42, %v30
    %v45 = vadd.f32 %v37, %v44
    %v46 = vlaneseq
    %v47 = vand.u32 %v46, 127
    %vm48 = vcmp.eq.s32.totalorder %v47, 0
    %49 = vrot.lane.b32.xlu0 %v45, 1
    %v50 = vpop.permute.xlu0 %49
    %v51 = vsel %vm48, 0.0, %v50
    %vm52 = vcmp.eq.s32.totalorder %v47, 127
    %53 = vrot.lane.b32.xlu0 %v45, 127
    %v54 = vpop.permute.xlu0 %53
    %v55 = vsel %vm52, 0.0, %v54
    %v56 = vld [vmem:[%s5] sm:$0xff]
    %v57 = vld [vmem:[%s6] sm:$0xff]
    %59 = vset.pattern.permute.xlu0 0
    %60 = vperm.xlu0 %59, %v57
    %v61 = vpop.permute.xlu0 %60
    %vm63 = vcmask 195584
    %v65 = vsel %vm63, %v56, 0
    %67 = vmatprep.subr.mxu0 0.0
    %68 = vmatpush1.msra.mxu0 %v51
    %69 = vmatprep.subr.mxu0 0.0
    %70 = vmatpush1.msra.mxu0 %v45
    %71 = vmatprep.subr.mxu0 0.0
    %72 = vmatpush1.msra.mxu0 %v55
    %73 = vmatprep.subr.mxu0 0.0
    %74 = vmatpush1.msra.mxu0 0.0
    %75 = vmatprep.subr.mxu0 0.0
    %76 = vmatpush1.msra.mxu0 0.0
    %77 = vmatprep.subr.mxu0 0.0
    %78 = vmatpush1.msra.mxu0 0.0
    %79 = vmatprep.subr.mxu0 0.0
    %80 = vmatpush1.msra.mxu0 0.0
    %81 = vmatprep.subr.mxu0 0.0
    %82 = vmatpush1.msra.mxu0 0.0
    %83 = vmatprep.subr.mxu0 0.0
    %84 = vmatpush1.msra.mxu0 0.0
    %85 = vmatprep.subr.mxu0 0.0
    %86 = vmatpush1.msra.mxu0 0.0
    %87 = vmatprep.subr.mxu0 0.0
    %88 = vmatpush1.msra.mxu0 0.0
    %89 = vmatprep.subr.mxu0 0.0
    %90 = vmatpush1.msra.mxu0 0.0
    %91 = vmatprep.subr.mxu0 0.0
    %92 = vmatpush1.msra.mxu0 0.0
    %93 = vmatprep.subr.mxu0 0.0
    %94 = vmatpush1.msra.mxu0 0.0
    %95 = vmatprep.subr.mxu0 0.0
    %96 = vmatpush1.msra.mxu0 0.0
    %97 = vmatprep.subr.mxu0 0.0
    %98 = vmatpush1.msra.mxu0 0.0
    %99 = vmatprep.subr.mxu0 0.0
    %100 = vmatpush1.msra.mxu0 0.0
    %101 = vmatprep.subr.mxu0 0.0
    %102 = vmatpush1.msra.mxu0 0.0
    %103 = vmatprep.subr.mxu0 0.0
    %104 = vmatpush1.msra.mxu0 0.0
    %105 = vmatprep.subr.mxu0 0.0
    %106 = vmatpush1.msra.mxu0 0.0
    %107 = vmatprep.subr.mxu0 0.0
    %108 = vmatpush1.msra.mxu0 0.0
    %109 = vmatprep.subr.mxu0 0.0
    %110 = vmatpush1.msra.mxu0 0.0
    %111 = vmatprep.subr.mxu0 0.0
    %112 = vmatpush1.msra.mxu0 0.0
    %113 = vmatprep.subr.mxu0 0.0
    %114 = vmatpush1.msra.mxu0 0.0
    %115 = vmatprep.subr.mxu0 0.0
    %116 = vmatpush1.msra.mxu0 0.0
    %117 = vmatprep.subr.mxu0 0.0
    %118 = vmatpush1.msra.mxu0 0.0
    %119 = vmatprep.subr.mxu0 0.0
    %120 = vmatpush1.msra.mxu0 0.0
    %121 = vmatprep.subr.mxu0 0.0
    %122 = vmatpush1.msra.mxu0 0.0
    %123 = vmatprep.subr.mxu0 0.0
    %124 = vmatpush1.msra.mxu0 0.0
    %125 = vmatprep.subr.mxu0 0.0
    %126 = vmatpush1.msra.mxu0 0.0
    %127 = vmatprep.subr.mxu0 0.0
    %128 = vmatpush1.msra.mxu0 0.0
    %129 = vmatprep.subr.mxu0 0.0
    %130 = vmatpush1.msra.mxu0 0.0
    %131 = vmatprep.mubr.f32.mxu0 0.0
    %132 = vmatmul.mubr.f32.gmra.mrb[0].mxu0 %v65
    %v133 = vpop.f32.mrb[0].mxu0
    %v134 = vadd.f32 %v61, %v133
    %v135 = vpop.f32.mrb[0].mxu0
    %136 = vdwg.mxu0
    %v137 = vsub.f32 %v134, %v30
    %v138 = vmul.f32 %v137, %v137
    %139 = vadd.xlane.f32.xlu0 %v138
    %v140 = vpop.xlane.xlu0 %139
    %v141 = vld [vmem:[%s4] sm:$0xff]
    %v142 = vmul.f32 %v140, %v141
    %vm143 = vcmask 7168
    %v144 = vsel %vm143, %v142, 0.0
    %145 = vadd.xlane.f32.xlu0 %v144
    %v146 = vpop.xlane.xlu0 %145
    %v147 = vrot.slane %v146, 4
    %v148 = vadd.f32 %v146, %v147
    %v149 = vrot.slane %v148, 2
    %v150 = vadd.f32 %v148, %v149
    %v151 = vrot.slane %v150, 1
    %v152 = vadd.f32 %v150, %v151
    %s153 = vtos %v152
    %s154 = scalar_lea.smem [#allocation2], 0
    %155 = sst [smem:[%s154]] %s153
    // Predicated region
    $region30: #{gaussian_diffusion_loss.1} parent=1 // pred_check
      _
    $region31: #{gaussian_diffusion_loss.1} parent=1 // pred_check_branch
      %157 = sbr.rel (0) target = $region33
    $region32: #{gaussian_diffusion_loss.1} parent=1 // pred_region
      %s159 = ssub.s32 16, 16
      %160 = vsyncadd [#allocation3], %s159
      %163 = dma.smem_to_hbm [#allocation2], 16, %s7, [#allocation3]
    $region33: #{gaussian_diffusion_loss.1} parent=1 // pred_fallthru
      _
    // Predicated region
    $region34: #{gaussian_diffusion_loss.1} parent=1 // pred_check
      _
    $region35: #{gaussian_diffusion_loss.1} parent=1 // pred_check_branch
      %165 = sbr.rel (0) target = $region37
    $region36: #{gaussian_diffusion_loss.1} parent=1 // pred_region
      %166 = dma.done [#allocation3], 16
    $region37: #{gaussian_diffusion_loss.1} parent=1 // pred_fallthru
      _
    %167 = sfence
    %168 = vsyncpa [#allocation3], 1

</llo_original>
